<compile_context>
chip_gen: v7x
topology: tpu7x:2x2x1
jax: 0.10.0
libtpu: 0.0.40
codegen_flags: <defaults>
</compile_context>

<pallas_src>
import functools
import math

import jax
import jax.numpy as jnp
from jax.experimental import pallas as pl
from jax.experimental.pallas import tpu as pltpu

LN_EPS = 1e-12  # BERT LayerNorm eps


# --------------------------------------------------------------------------- #
# Helpers
# --------------------------------------------------------------------------- #
def _pick_tile(dim, target, align):
    """Largest tile <= target that divides dim and is a multiple of align."""
    if dim <= target:
        return dim
    t = (target // align) * align
    while t >= align:
        if dim % t == 0:
            return t
        t -= align
    return dim


def _pick_head_group(nH, Dh):
    """Heads per group so one group's Q/K/V slice is 128-lane aligned."""
    for g in range(1, nH + 1):
        if nH % g == 0 and (g * Dh) % 128 == 0:
            return g
    return nH  # fall back: one group == all heads (block spans the full dim)


def _compiler_params(semantics, est_bytes):
    # Explicit VMEM budget (perf review): v7x has 64 MiB physical / 32 MiB
    # default scoped VMEM.  Keep below physical so internal scratch still fits.
    limit = min(max(int(est_bytes) + (8 << 20), 32 << 20), 56 << 20)
    return pltpu.CompilerParams(dimension_semantics=semantics,
                                vmem_limit_bytes=limit)


# --------------------------------------------------------------------------- #
# Fused matmul kernels:  y = act(x @ w + b) [+ residual -> LayerNorm]
# Epilogue math stays f32 (v5e VPU/EUP have no bf16).
# --------------------------------------------------------------------------- #
def _epilogue(y, b_ref, res_ref, g_ref, beta_ref, activation, fuse_ln):
    y = y + b_ref[...].astype(jnp.float32)
    if activation == "gelu":
        # TODO(synk): HF BERT uses exact erf-GELU; tanh approximation used here
        # (guaranteed Mosaic elementwise lowering), diff < 1e-3.
        y = 0.5 * y * (1.0 + jnp.tanh(
            0.7978845608028654 * (y + 0.044715 * y * y * y)))
    elif activation == "tanh":
        y = jnp.tanh(y)
    if fuse_ln:
        y = y + res_ref[...].astype(jnp.float32)
        mean = jnp.mean(y, axis=-1, keepdims=True)
        yc = y - mean
        var = jnp.mean(yc * yc, axis=-1, keepdims=True)
        y = yc * jax.lax.rsqrt(var + LN_EPS)
        y = y * g_ref[...].astype(jnp.float32) + beta_ref[...].astype(jnp.float32)
    return y


def _linear_kernel(*refs, activation, fuse_ln):
    """Single-K-block (resident weight) variant: no scratch, no K loop."""
    if fuse_ln:
        x_ref, w_ref, b_ref, res_ref, g_ref, beta_ref, o_ref = refs
    else:
        x_ref, w_ref, b_ref, o_ref = refs
        res_ref = g_ref = beta_ref = None
    y = jnp.dot(x_ref[...], w_ref[...], preferred_element_type=jnp.float32)
    y = _epilogue(y, b_ref, res_ref, g_ref, beta_ref, activation, fuse_ln)
    o_ref[...] = y.astype(o_ref.dtype)


def _linear_kernel_ktiled(*refs, activation, fuse_ln):
    """Fallback for very large K: K-tiled with an f32 accumulator scratch."""
    if fuse_ln:
        x_ref, w_ref, b_ref, res_ref, g_ref, beta_ref, o_ref, acc_ref = refs
    else:
        x_ref, w_ref, b_ref, o_ref, acc_ref = refs
        res_ref = g_ref = beta_ref = None
    k = pl.program_id(2)

    @pl.when(k == 0)
    def _():
        acc_ref[...] = jnp.zeros_like(acc_ref)

    acc_ref[...] += jnp.dot(x_ref[...], w_ref[...],
                            preferred_element_type=jnp.float32)

    @pl.when(k == pl.num_programs(2) - 1)
    def _():
        y = _epilogue(acc_ref[...], b_ref, res_ref, g_ref, beta_ref,
                      activation, fuse_ln)
        o_ref[...] = y.astype(o_ref.dtype)


def linear(x, w, b, activation="none", residual=None, gamma=None, beta=None,
           out_dtype=jnp.bfloat16):
    """(M,K)@(K,N)+b with optional fused GELU / residual+LayerNorm epilogue."""
    M, K = x.shape
    K2, N = w.shape
    assert K == K2
    fuse_ln = residual is not None

    # bf16 activations pack 16 sublanes/vreg -> 16-aligned row tiles; 512-row
    # tiles sit near the HBM roofline (vs ~63% at 256 rows).
    tm = _pick_tile(M, 512, 16)

    # Resident-weight scheme: BERT-scale K (768 / 3072) fits one VMEM block,
    # so the K grid axis is collapsed entirely.
    single_k = K <= 4096
    if fuse_ln or (single_k and K * N * 2 <= (12 << 20)):
        tn = N                       # LN needs the full row / weight fits VMEM
    else:
        tn = _pick_tile(N, 512, 256)  # 256-aligned for the 2x256 MXU (v6e/v7x)

    if single_k:
        tk = K
        grid = (M // tm, N // tn)
        in_specs = [
            pl.BlockSpec((tm, K), lambda i, j: (i, 0)),
            # Weight block index is constant along i (and along j when tn==N):
            # the pipeliner skips the redundant re-DMA so the weight stays
            # resident in VMEM instead of being re-streamed per M tile.
            # TODO(synk): on v7x consider pipeline_mode=pl.Buffered(1) here to
            # halve its VMEM footprint (kept default-buffered for portability).
            pl.BlockSpec((K, tn), lambda i, j: (0, j)),
            pl.BlockSpec((1, tn), lambda i, j: (0, j)),
        ]
        args = [x, w, b]
        if fuse_ln:
            in_specs += [
                pl.BlockSpec((tm, tn), lambda i, j: (i, j)),
                pl.BlockSpec((1, tn), lambda i, j: (0, j)),
                pl.BlockSpec((1, tn), lambda i, j: (0, j)),
            ]
            args += [residual, gamma, beta]
        out_specs = pl.BlockSpec((tm, tn), lambda i, j: (i, j))
        kernel = functools.partial(_linear_kernel, activation=activation,
                                   fuse_ln=fuse_ln)
        scratch = []
        semantics = ("parallel", "parallel")
    else:
        tk = _pick_tile(K, 2048, 256)
        grid = (M // tm, N // tn, K // tk)
        in_specs = [
            pl.BlockSpec((tm, tk), lambda i, j, k: (i, k)),
            pl.BlockSpec((tk, tn), lambda i, j, k: (k, j)),
            pl.BlockSpec((1, tn), lambda i, j, k: (0, j)),
        ]
        args = [x, w, b]
        if fuse_ln:
            in_specs += [
                pl.BlockSpec((tm, tn), lambda i, j, k: (i, j)),
                pl.BlockSpec((1, tn), lambda i, j, k: (0, j)),
                pl.BlockSpec((1, tn), lambda i, j, k: (0, j)),
            ]
            args += [residual, gamma, beta]
        out_specs = pl.BlockSpec((tm, tn), lambda i, j, k: (i, j))
        kernel = functools.partial(_linear_kernel_ktiled, activation=activation,
                                   fuse_ln=fuse_ln)
        scratch = [pltpu.VMEM((tm, tn), jnp.float32)]
        semantics = ("parallel", "parallel", "arbitrary")

    # Rough VMEM estimate: double-buffered blocks + f32 epilogue temps.
    est = 2 * (tm * tk * 2 + tk * tn * 2 + tn * 4 + tm * tn * 2) + tm * tn * 4
    if fuse_ln:
        est += 2 * (tm * tn * 2 + 2 * tn * 4)

    return pl.pallas_call(
        kernel,
        out_shape=jax.ShapeDtypeStruct((M, N), out_dtype),
        grid=grid,
        in_specs=in_specs,
        out_specs=out_specs,
        scratch_shapes=scratch,
        compiler_params=_compiler_params(semantics, est),
    )(*args)


# --------------------------------------------------------------------------- #
# Row-tiled LayerNorm (embedding output only)
# --------------------------------------------------------------------------- #
def _layernorm_kernel(x_ref, g_ref, b_ref, o_ref):
    x = x_ref[...].astype(jnp.float32)
    mean = jnp.mean(x, axis=-1, keepdims=True)
    xc = x - mean
    var = jnp.mean(xc * xc, axis=-1, keepdims=True)
    y = xc * jax.lax.rsqrt(var + LN_EPS)
    o_ref[...] = (y * g_ref[...] + b_ref[...]).astype(o_ref.dtype)


def layernorm(x, gamma, beta, out_dtype=jnp.bfloat16):
    M, H = x.shape
    tm = _pick_tile(M, 512, 16)
    return pl.pallas_call(
        _layernorm_kernel,
        out_shape=jax.ShapeDtypeStruct((M, H), out_dtype),
        grid=(M // tm,),
        in_specs=[
            pl.BlockSpec((tm, H), lambda i: (i, 0)),
            pl.BlockSpec((1, H), lambda i: (0, 0)),
            pl.BlockSpec((1, H), lambda i: (0, 0)),
        ],
        out_specs=pl.BlockSpec((tm, H), lambda i: (i, 0)),
        compiler_params=pltpu.CompilerParams(dimension_semantics=("parallel",)),
    )(x, gamma, beta)


# --------------------------------------------------------------------------- #
# Multi-head self-attention over lane-aligned head groups.
#   grid = (batch, head_group): one (S, 3*G*Dh) QKV block per step, G heads
#   computed per step (G*Dh is 128-lane aligned at BERT scale), per-head
#   contexts written into an f32 VMEM scratch, single lane-dense store.
#   1/sqrt(Dh) is pre-folded into the Q projection.
# --------------------------------------------------------------------------- #
def _attention_kernel(qkv_ref, m_ref, o_ref, ctx_ref, *, hpg, Dh):
    GD = hpg * Dh
    qkv = qkv_ref[0]                                   # (S, 3*GD) bf16
    S = qkv.shape[0]
    # Hoist the additive-mask broadcast out of the head loop (no CSE of
    # broadcast_in_dim inside unrolled loops).
    mask = jnp.broadcast_to(m_ref[0], (S, S)).astype(jnp.float32)
    q_all = qkv[:, :GD]
    k_all = qkv[:, GD:2 * GD]
    v_all = qkv[:, 2 * GD:3 * GD]
    # Contract the last dims of q and k directly (q @ k^T without an explicit
    # transpose -> no per-head XLU transpose).
    dnums = (((1,), (1,)), ((), ()))
    # Static loop over the heads of ONE group (<= 2 heads at BERT-base scale),
    # so live ranges are bounded to a single 128-lane slab per grid step.
    for h in range(hpg):
        q = q_all[:, h * Dh:(h + 1) * Dh]
        k = k_all[:, h * Dh:(h + 1) * Dh]
        v = v_all[:, h * Dh:(h + 1) * Dh]
        s = jax.lax.dot_general(q, k, dnums,
                                preferred_element_type=jnp.float32) + mask
        s = s - jnp.max(s, axis=-1, keepdims=True)
        p = jnp.exp(s)
        p = p * pl.reciprocal(jnp.sum(p, axis=-1, keepdims=True), approx=True)
        ctx_ref[:, h * Dh:(h + 1) * Dh] = jnp.dot(
            p.astype(jnp.bfloat16), v, preferred_element_type=jnp.float32)
    o_ref[0] = ctx_ref[...].astype(o_ref.dtype)        # one lane-dense store


def attention(qkv, add_mask, nH, Dh, hpg):
    """qkv: (B, S, 3H) bf16 in head-group layout; add_mask: (B, 1, S) f32."""
    B, S, H3 = qkv.shape
    H = nH * Dh
    GD = hpg * Dh
    nG = nH // hpg
    kernel = functools.partial(_attention_kernel, hpg=hpg, Dh=Dh)
    # TODO(synk): for S >= ~1024 switch to flash-style KV tiling (running
    # max/sum) instead of holding full (S,S) score matrices per head.
    est = 2 * (S * 3 * GD * 2 + S * GD * 2 + S * 4) + S * GD * 4 + 3 * S * S * 4
    return pl.pallas_call(
        kernel,
        out_shape=jax.ShapeDtypeStruct((B, S, H), jnp.bfloat16),
        grid=(B, nG),                                   # 2 parallel axes (v7x)
        in_specs=[
            pl.BlockSpec((1, S, 3 * GD), lambda b, g: (b, 0, g)),
            pl.BlockSpec((1, 1, S), lambda b, g: (b, 0, 0)),
        ],
        out_specs=pl.BlockSpec((1, S, GD), lambda b, g: (b, 0, g)),
        scratch_shapes=[pltpu.VMEM((S, GD), jnp.float32)],
        compiler_params=_compiler_params(("parallel", "parallel"), est),
    )(qkv, add_mask)


# --------------------------------------------------------------------------- #
# Parameters (deterministic synthetic init, BERT-style N(0, 0.02))
# Weights feeding the MXU are bf16; biases / LN affine stay f32.
# --------------------------------------------------------------------------- #
def init_params(key, cfg):
    H, I, V, P = cfg["hidden"], cfg["inter"], cfg["vocab"], cfg["max_pos"]
    nC = cfg["num_classes"]
    nH = cfg["heads"]
    Dh = H // nH
    hpg = _pick_head_group(nH, Dh)
    nG = nH // hpg
    scale = 1.0 / math.sqrt(Dh)
    keys = iter(jax.random.split(key, 64))

    def w(shape):
        return (0.02 * jax.random.normal(next(keys), shape)).astype(jnp.float32)

    def zeros(n):
        return jnp.zeros((1, n), jnp.float32)

    def ones(n):
        return jnp.ones((1, n), jnp.float32)

    params = {
        "word_emb": w((V, H)),
        "pos_emb": w((P, H)),
        "type_emb": w((2, H)),
        "emb_ln_g": ones(H),
        "emb_ln_b": zeros(H),
        "pool_w": w((H, H)),
        "pool_b": zeros(H),
        # ClfHead(hidden_size, num_classes, dropout_prob=0.5):
        # int hid_sizes -> [Dropout, Linear, Tanh][:-1] == Dropout + Linear
        "clf_w": w((H, nC)),
        "clf_b": zeros(nC),
        "layers": [],
    }
    # TODO(synk): on v7x the big weights (wqkv/wo/wi/wf) could be stored fp8
    # with per-output-channel scales applied in the f32 epilogue (~2x MXU
    # throughput, half the weight DMA); int8 would be the v5e/v6e analogue.
    for _ in range(cfg["layers"]):
        wq, wk, wv = w((H, H)) * scale, w((H, H)), w((H, H))   # fold 1/sqrt(Dh)
        bq, bk, bv = zeros(H) * scale, zeros(H), zeros(H)
        # Head-grouped fused QKV layout: per group g the output columns are
        # [Q_g | K_g | V_g], each hpg*Dh wide (128-lane aligned at BERT scale),
        # so the attention BlockSpec slices one aligned group per grid step.
        wgrp, bgrp = [], []
        for g in range(nG):
            sl = slice(g * hpg * Dh, (g + 1) * hpg * Dh)
            wgrp += [wq[:, sl], wk[:, sl], wv[:, sl]]
            bgrp += [bq[:, sl], bk[:, sl], bv[:, sl]]
        params["layers"].append({
            "wqkv": jnp.concatenate(wgrp, axis=1).astype(jnp.bfloat16),
            "bqkv": jnp.concatenate(bgrp, axis=1),
            "wo": w((H, H)).astype(jnp.bfloat16), "bo": zeros(H),
            "ln1_g": ones(H), "ln1_b": zeros(H),
            "wi": w((H, I)).astype(jnp.bfloat16), "bi": zeros(I),
            "wf": w((I, H)).astype(jnp.bfloat16), "bf": zeros(H),
            "ln2_g": ones(H), "ln2_b": zeros(H),
        })
    return params


# --------------------------------------------------------------------------- #
# Forward pass (glue in plain JAX, hot path in Pallas kernels)
# --------------------------------------------------------------------------- #
def sentiment_bert_forward(params, input_ids, attention_mask, cfg):
    B, S = input_ids.shape
    H = cfg["hidden"]
    nH = cfg["heads"]
    Dh = H // nH
    hpg = _pick_head_group(nH, Dh)
    M = B * S

    # --- embeddings (gather is glue) ---
    x = (params["word_emb"][input_ids]
         + params["pos_emb"][:S][None, :, :]
         + params["type_emb"][0][None, None, :])                    # (B,S,H) f32
    # TODO(synk): token_type hard-coded to segment 0; embedding dropout omitted
    # (inference/eval semantics).
    x2 = layernorm(x.reshape(M, H), params["emb_ln_g"], params["emb_ln_b"])

    # additive attention mask, kept at (B, 1, S): no per-head blow-up in HBM
    add_mask = (1.0 - attention_mask.astype(jnp.float32))[:, None, :] * -10000.0

    for layer in params["layers"]:
        # TODO(synk): qkv/ctx still round-trip HBM between kernels; a fully
        # fused attention block would save ~9 MiB write+read per layer at
        # BERT-base scale (lower priority than tiling fixes).
        qkv = linear(x2, layer["wqkv"], layer["bqkv"])               # (M,3H) bf16
        ctx = attention(qkv.reshape(B, S, 3 * H), add_mask, nH, Dh, hpg)
        # attention output projection with fused bias + residual + LayerNorm
        x2 = linear(ctx.reshape(M, H), layer["wo"], layer["bo"],
                    residual=x2, gamma=layer["ln1_g"], beta=layer["ln1_b"])
        # feed-forward: GELU fused in first matmul, residual+LN in second
        inter = linear(x2, layer["wi"], layer["bi"], activation="gelu")
        x2 = linear(inter, layer["wf"], layer["bf"],
                    residual=x2, gamma=layer["ln2_g"], beta=layer["ln2_b"])

    # --- pooler (Linear + tanh on [CLS]) and ClfHead (Dropout + Linear) ---
    # Tiny matmuls with lane-width-3 output: plain XLA (a pallas_call here is
    # pure launch overhead). Dropout is identity at eval.
    cls = x2.reshape(B, S, H)[:, 0, :].astype(jnp.float32)           # (B, H)
    pooled = jnp.tanh(cls @ params["pool_w"] + params["pool_b"])
    logits = pooled @ params["clf_w"] + params["clf_b"]
    return logits


# --------------------------------------------------------------------------- #
if __name__ == "__main__":
    cfg = dict(hidden=32, heads=4, layers=2, inter=64,
               vocab=128, max_pos=16, num_classes=3)

    key = jax.random.PRNGKey(0)
    pkey, ikey = jax.random.split(key)
    params = init_params(pkey, cfg)

    B, S = 2, 8
    input_ids = jax.random.randint(ikey, (B, S), 0, cfg["vocab"], dtype=jnp.int32)
    # mask out the last two tokens of sample 1 to exercise the attention mask
    attention_mask = jnp.ones((B, S), jnp.int32).at[1, 6:].set(0)

    logits = sentiment_bert_forward(params, input_ids, attention_mask, cfg)
    jax.block_until_ready(logits)
    assert logits.shape == (B, cfg["num_classes"])
    assert bool(jnp.all(jnp.isfinite(logits)))
    print("KERNEL_OK")
</pallas_src>

<mosaic_0001>
module attributes {stable_mosaic.version = 11 : i64} {
  func.func @_layernorm_kernel(%arg0: i32, %arg1: memref<16x32xf32, #tpu.memory_space<vmem>>, %arg2: memref<1x32xf32, #tpu.memory_space<vmem>>, %arg3: memref<1x32xf32, #tpu.memory_space<vmem>>, %arg4: memref<16x32xbf16, #tpu.memory_space<vmem>>) attributes {dimension_semantics = [#tpu.dimension_semantics<parallel>], iteration_bounds = array<i64: 1>, scalar_prefetch = 0 : i64, scratch_operands = 0 : i64, tpu.core_type = #tpu.core_type<tc>, window_params = [{transform_indices = @transform_0, window_bounds = array<i64: 16, 32>}, {pipeline_mode = #tpu.pipeline_mode<synchronous>, transform_indices = @transform_1, window_bounds = array<i64: 1, 32>}, {pipeline_mode = #tpu.pipeline_mode<synchronous>, transform_indices = @transform_2, window_bounds = array<i64: 1, 32>}, {transform_indices = @transform_3, window_bounds = array<i64: 16, 32>}]} {
    %c0 = arith.constant 0 : index
    %c0_0 = arith.constant 0 : index
    %0 = vector.load %arg1[%c0, %c0_0] : memref<16x32xf32, #tpu.memory_space<vmem>>, vector<16x32xf32>
    %cst = arith.constant dense<0.000000e+00> : vector<16xf32>
    %1 = vector.multi_reduction <add>, %0, %cst [1] : vector<16x32xf32> to vector<16xf32>
    %2 = vector.shape_cast %1 : vector<16xf32> to vector<16x1xf32>
    %cst_1 = arith.constant 3.200000e+01 : f32
    %3 = vector.broadcast %cst_1 : f32 to vector<16x1xf32>
    %4 = arith.divf %2, %3 : vector<16x1xf32>
    %5 = vector.broadcast %4 : vector<16x1xf32> to vector<16x32xf32>
    %6 = arith.subf %0, %5 : vector<16x32xf32>
    %7 = arith.mulf %6, %6 : vector<16x32xf32>
    %cst_2 = arith.constant dense<0.000000e+00> : vector<16xf32>
    %8 = vector.multi_reduction <add>, %7, %cst_2 [1] : vector<16x32xf32> to vector<16xf32>
    %9 = vector.shape_cast %8 : vector<16xf32> to vector<16x1xf32>
    %cst_3 = arith.constant 3.200000e+01 : f32
    %10 = vector.broadcast %cst_3 : f32 to vector<16x1xf32>
    %11 = arith.divf %9, %10 : vector<16x1xf32>
    %cst_4 = arith.constant 9.99999996E-13 : f32
    %12 = vector.broadcast %cst_4 : f32 to vector<16x1xf32>
    %13 = arith.addf %11, %12 : vector<16x1xf32>
    %14 = math.rsqrt %13 : vector<16x1xf32>
    %15 = vector.broadcast %14 : vector<16x1xf32> to vector<16x32xf32>
    %16 = arith.mulf %6, %15 : vector<16x32xf32>
    %c0_5 = arith.constant 0 : index
    %c0_6 = arith.constant 0 : index
    %17 = vector.load %arg2[%c0_5, %c0_6] : memref<1x32xf32, #tpu.memory_space<vmem>>, vector<1x32xf32>
    %18 = vector.broadcast %17 : vector<1x32xf32> to vector<16x32xf32>
    %19 = arith.mulf %16, %18 : vector<16x32xf32>
    %c0_7 = arith.constant 0 : index
    %c0_8 = arith.constant 0 : index
    %20 = vector.load %arg3[%c0_7, %c0_8] : memref<1x32xf32, #tpu.memory_space<vmem>>, vector<1x32xf32>
    %21 = vector.broadcast %20 : vector<1x32xf32> to vector<16x32xf32>
    %22 = arith.addf %19, %21 : vector<16x32xf32>
    %23 = arith.truncf %22 : vector<16x32xf32> to vector<16x32xbf16>
    %c0_9 = arith.constant 0 : index
    %c0_10 = arith.constant 0 : index
    %24 = vector.load %arg4[%c0_9, %c0_10] : memref<16x32xbf16, #tpu.memory_space<vmem>>, vector<16x32xbf16>
    tpu.vector_store %arg4[%c0_9, %c0_10], %23 {strides = array<i32>} : memref<16x32xbf16, #tpu.memory_space<vmem>>, vector<16x32xbf16>,
    return
  }
  func.func @transform_0(%arg0: i32) -> (i32, i32) {
    %c0_i32 = arith.constant 0 : i32
    %c0_i32_0 = arith.constant 0 : i32
    return %arg0, %c0_i32 : i32, i32
  }
  func.func @transform_1(%arg0: i32) -> (i32, i32) {
    %c0_i32 = arith.constant 0 : i32
    %c0_i32_0 = arith.constant 0 : i32
    %c0_i32_1 = arith.constant 0 : i32
    return %c0_i32, %c0_i32_0 : i32, i32
  }
  func.func @transform_2(%arg0: i32) -> (i32, i32) {
    %c0_i32 = arith.constant 0 : i32
    %c0_i32_0 = arith.constant 0 : i32
    %c0_i32_1 = arith.constant 0 : i32
    return %c0_i32, %c0_i32_0 : i32, i32
  }
  func.func @transform_3(%arg0: i32) -> (i32, i32) {
    %c0_i32 = arith.constant 0 : i32
    %c0_i32_0 = arith.constant 0 : i32
    return %arg0, %c0_i32 : i32, i32
  }
}

</mosaic_0001>

<llo_original>
// kernel: tpu_custom_call.1
$region0: #{tpu_custom_call.1}
  #allocation0 [shape = 'u32[]', space=smem, size = 0x4, offset = 0x4, fixed_abs, tag = 'smem constant byte address 0x4 - core index']
  #allocation1 [shape = 'u32[144,128]{1,0:T(1,128)}', space=vmem, size = 0x12000, scoped, tag = 'internal scratch']
  %s0 = inlined_call_operand.hbm [shape: f32[16,32], index: 0, kind: input, shape index: {}]
  %s1 = inlined_call_operand.vmem [shape: f32[1,32], index: 1, kind: input, shape index: {}]
  %s2 = inlined_call_operand.vmem [shape: f32[1,32], index: 2, kind: input, shape index: {}]
  %s3 = inlined_call_operand.hbm [shape: bf16[16,32], index: 3, kind: output, shape index: {}]
  %s4 = sld [smem:[#allocation0]]
  $region26: #{tpu_custom_call.1} parent=0
    _
  %s6 = ssub.s32 1, %s4
  %s7 = scalar_select 0, %s6, %s4
  $region1: #{tpu_custom_call.1} parent=0
    #allocation2 [shape = 'u8[8192]{0}', space=vmem, size = 0x2000, scoped, tag = 'input window, operand 0, single buffered']
    #allocation3 [shape = 's32[1]{0}', space=sflag, size = 0x4, scoped, tag = 'scoped memory for tpu_custom_call.1']
    #allocation4 [shape = 's32[1]{0}', space=sflag, size = 0x4, scoped, tag = 'scoped memory for tpu_custom_call.1']
    #allocation5 [shape = 'u8[4096]{0}', space=vmem, size = 0x1000, scoped, tag = 'output window, operand 0, single buffered']
    %8 = vsyncpa [#allocation3], 0
    %9 = vsyncpa [#allocation4], 0
    // Predicated region
    $region2: #{tpu_custom_call.1} parent=1 // pred_check
      _
    $region3: #{tpu_custom_call.1} parent=1 // pred_check_branch
      %11 = sbr.rel (0) target = $region5
    $region4: #{tpu_custom_call.1} parent=1 // pred_region
      %s13 = ssub.s32 256, 256
      %14 = vsyncadd [#allocation3], %s13
      %s15 = sshll.u32 [#allocation2], 4
      %s16 = int_to_ptr.vmem [resolvable:$true] %s15
      %21 = dma.hbm_to_vmem [thread:$0]  %s0, 256, %s16, [#allocation3], 128, 128, 8
    $region5: #{tpu_custom_call.1} parent=1 // pred_fallthru
      _
    // Predicated region
    $region6: #{tpu_custom_call.1} parent=1 // pred_check
      _
    $region7: #{tpu_custom_call.1} parent=1 // pred_check_branch
      %23 = sbr.rel (0) target = $region9
    $region8: #{tpu_custom_call.1} parent=1 // pred_region
      _
    $region9: #{tpu_custom_call.1} parent=1 // pred_fallthru
      _
    // Predicated region
    $region10: #{tpu_custom_call.1} parent=1 // pred_check
      _
    $region11: #{tpu_custom_call.1} parent=1 // pred_check_branch
      %25 = sbr.rel (0) target = $region13
    $region12: #{tpu_custom_call.1} parent=1 // pred_region
      _
    $region13: #{tpu_custom_call.1} parent=1 // pred_fallthru
      _
    // Predicated region
    $region14: #{tpu_custom_call.1} parent=1 // pred_check
      _
    $region15: #{tpu_custom_call.1} parent=1 // pred_check_branch
      %27 = sbr.rel (0) target = $region17
    $region16: #{tpu_custom_call.1} parent=1 // pred_region
      %28 = dma.done [#allocation3], 256
    $region17: #{tpu_custom_call.1} parent=1 // pred_fallthru
      _
    %v29 = vld [vmem:[#allocation2] sm:$0xff]
    %v30 = vld [vmem:[#allocation2 + $0x8] sm:$0xff]
    %vm31 = vcmask 261120
    %v32 = vsel %vm31, %v29, 0.0
    %33 = vadd.xlane.f32.xlu0 %v32
    %v34 = vpop.xlane.xlu0 %33
    %v35 = vsel %vm31, %v30, 0.0
    %36 = vadd.xlane.f32.xlu0 %v35
    %v37 = vpop.xlane.xlu0 %36
    %v38 = vrcp.pop 32.0
    %v39 = vmul.f32 %v34, %v38
    %v40 = vmul.f32 %v37, %v38
    %v41 = vsub.f32 %v29, %v39
    %v42 = vsub.f32 %v30, %v40
    %v43 = vmul.f32 %v41, %v41
    %v44 = vmul.f32 %v42, %v42
    %v45 = vsel %vm31, %v43, 0.0
    %46 = vadd.xlane.f32.xlu0 %v45
    %v47 = vpop.xlane.xlu0 %46
    %v48 = vsel %vm31, %v44, 0.0
    %49 = vadd.xlane.f32.xlu0 %v48
    %v50 = vpop.xlane.xlu0 %49
    %v51 = vmul.f32 %v47, %v38
    %v52 = vmul.f32 %v50, %v38
    %v53 = vadd.f32 %v51, 1e-12
    %v54 = vadd.f32 %v52, 1e-12
    %v55 = vrsqrt.pop %v53
    %v56 = vrsqrt.pop %v54
    %v57 = vmul.f32 %v41, %v55
    %v58 = vmul.f32 %v42, %v56
    %v59 = vld [vmem:[%s1] sm:$0x1]
    %v61 = vlaneseq
    %v62 = vshrl.u32 %v61, 7
    %v63 = vsub.s32 0, %v62
    %v64 = vrot.slane %v59, %v63
    %v66 = vmul.f32 %v57, %v64
    %v67 = vmul.f32 %v58, %v64
    %v68 = vld [vmem:[%s2] sm:$0x1]
    %v70 = vlaneseq
    %v71 = vshrl.u32 %v70, 7
    %v72 = vsub.s32 0, %v71
    %v73 = vrot.slane %v68, %v72
    %v75 = vadd.f32 %v66, %v73
    %v76 = vadd.f32 %v67, %v73
    %v77 = vpack.c.bf16 %v76, %v75
    %v79 = vunpack.c.l.b16 %v77
    %v80 = vunpack.c.h.b16 %v77
    %v81 = vpack.c.b16 %v79, %v79
    %v82 = vpack.c.b16 %v80, %v80
    %vm85 = vcmask 257024
    %86 = vst.msk [vmem:[#allocation5] sm:$0xf] %vm85, %v81
    %87 = vst.msk [vmem:[#allocation5 + $0x4] sm:$0xf] %vm85, %v82
    // Predicated region
    $region18: #{tpu_custom_call.1} parent=1 // pred_check
      _
    $region19: #{tpu_custom_call.1} parent=1 // pred_check_branch
      %89 = sbr.rel (0) target = $region21
    $region20: #{tpu_custom_call.1} parent=1 // pred_region
      %s91 = ssub.s32 128, 128
      %92 = vsyncadd [#allocation4], %s91
      %s93 = sshll.u32 [#allocation5], 4
      %s94 = int_to_ptr.vmem [resolvable:$true] %s93
      %99 = dma.vmem_to_hbm [thread:$0]  %s94, 128, %s3, [#allocation4], 64, 64, 4
    $region21: #{tpu_custom_call.1} parent=1 // pred_fallthru
      _
    // Predicated region
    $region22: #{tpu_custom_call.1} parent=1 // pred_check
      _
    $region23: #{tpu_custom_call.1} parent=1 // pred_check_branch
      %101 = sbr.rel (0) target = $region25
    $region24: #{tpu_custom_call.1} parent=1 // pred_region
      %102 = dma.done [#allocation4], 128
    $region25: #{tpu_custom_call.1} parent=1 // pred_fallthru
      _
    %103 = vsyncpa [#allocation3], 1
    %104 = vsyncpa [#allocation4], 1

</llo_original>
